<compile_context>
chip_gen: v7x
topology: tpu7x:2x2x1
jax: 0.10.0
libtpu: 0.0.40
codegen_flags: <defaults>
</compile_context>

<pallas_src>
import functools

import jax
import jax.numpy as jnp
import numpy as np
from jax.experimental import pallas as pl
from jax.experimental.pallas import tpu as pltpu


def _round_up(x, m):
    return ((x + m - 1) // m) * m


def _padded_row_bytes(tau, tauP, N):
    """Lane-padding-aware f32 bytes of VMEM per batch row for ONE pipeline buffer set."""
    K = tauP * tau
    lane = lambda n: _round_up(max(int(n), 1), 128)
    return 4 * (tau * lane(N)            # q tile            (tau, TB, N->128)
                + tauP * lane(N)         # next_n_q tile     (tauP, TB, N->128)
                + lane(2)                # packed int32 actions      (TB, 2->128)
                + lane(tau + 2)          # packed f32 side inputs    (TB, tau+2->128)
                + lane(1)                # td output                 (TB, 1->128)
                + 2 * lane(K))           # be / qhl outputs          (TB, K)


def _pick_batch_tile(B, tau, tauP, N):
    """Largest multiple-of-8 batch tile whose padded, double-buffered footprint stays
    well inside v5e's 16 MiB default scoped VMEM, with >= 2 (even) grid steps whenever
    possible so v7x's two TensorCores both get work."""
    per_row = _padded_row_bytes(tau, tauP, N)
    budget = 10 * 1024 * 1024            # double-buffered working-set budget (bytes)
    tb_max = max(8, ((budget // (2 * per_row)) // 8) * 8)
    tb_max = min(tb_max, 512)
    if B <= 8:
        return B
    n_steps = max(2, pl.cdiv(B, tb_max))     # >= 2 steps: megacore sharding on v7x
    if n_steps % 2:
        n_steps += 1                         # even step count balances the 2 cores
    tb = _round_up(pl.cdiv(B, n_steps), 8)
    return max(8, min(tb, tb_max, B))


def _iqn_nstep_td_kernel(kappa, with_buffers,
                         q_ref, nq_ref, acts_ref, side_ref, sel_ref, *out_refs):
    tau, TB, N = q_ref.shape
    tauP = nq_ref.shape[0]
    f32 = jnp.float32

    if with_buffers:
        td_ref, be_ref, qhl_ref = out_refs
    else:
        (td_ref,) = out_refs

    q = q_ref[...]                        # (tau, TB, N)   native layout
    nq = nq_ref[...]                      # (tauP, TB, N)  native layout
    acts = acts_ref[...]                  # (TB, 2) int32: [action | next_n_action]
    side = side_ref[...]                  # (TB, tau+2) f32: [rq_0..rq_{tau-1} | rsum | c]
    act = acts[:, 0:1]                    # (TB, 1)
    nact = acts[:, 1:2]                   # (TB, 1)
    rq = side[:, :tau]                    # (TB, tau)
    rsum = side[:, tau:tau + 1]           # (TB, 1)  sum_t gamma^t * r[t,b]
    c = side[:, tau + 1:tau + 2]          # (TB, 1)  value_gamma * (1 - done)

    # Stacked grid-invariant 0/1 selectors (k = j*tau + i packed on the lane axis):
    #   rows [0, tauP):        expand_j[j, k] = 1 iff k // tau == j
    #   rows [tauP, tauP+tau): expand_i[i, k] = 1 iff k %  tau == i
    expand_j = sel_ref[0:tauP, :]                 # (tauP, K)
    expand_i = sel_ref[tauP:tauP + tau, :]        # (tau, K)

    # One-hot action masks built in-kernel (iota + compare on the VPU; avoids 2*B*N
    # f32 one-hot operands in HBM).
    lane_n = jax.lax.broadcasted_iota(jnp.int32, (TB, N), 1)
    aoh = (lane_n == act).astype(f32)             # (TB, N)
    naoh = (lane_n == nact).astype(f32)           # (TB, N)

    # Gather Q(s,a) / Q(s',a'): mask + lane reduce (no TPU gather), then a tiny 2-D
    # transpose to batch-major rows.
    # TODO(synk): on v7x a lane-densified gather (in-kernel (tau,TB,N)->(TB,tau*N)
    # relayout + dense constant-selector matmul) would lift the 16/128 lane utilization
    # of this multiply+reduce; kept simple/robust here.
    qsa = jnp.sum(q * aoh[None, :, :], axis=2).T      # (TB, tau)
    nqsa = jnp.sum(nq * naoh[None, :, :], axis=2).T   # (TB, tauP)

    # Pre-scale by c on the narrow (TB, tauP) shape, then replicate onto the K lanes
    # with tiny 0/1 matmuls on the otherwise-idle MXU.
    be = (jnp.dot(nqsa * c, expand_j, preferred_element_type=f32)
          - jnp.dot(qsa, expand_i, preferred_element_type=f32)
          + rsum)                                      # (TB, K) bellman error
    rq_rep = jnp.dot(rq, expand_i, preferred_element_type=f32)   # (TB, K): rq[b, k%tau]

    abs_be = jnp.abs(be)
    # huber/kappa with 1/kappa folded into the branch constants (no trailing wide mul).
    huber_over_k = jnp.where(abs_be <= kappa,
                             (0.5 / kappa) * be * be,
                             abs_be - 0.5 * kappa)
    ind = (be < 0.0).astype(f32)
    qhl = jnp.abs(rq_rep - ind) * huber_over_k         # (TB, K)

    if with_buffers:
        be_ref[...] = be.astype(be_ref.dtype)          # lane-dense stores
        qhl_ref[...] = qhl.astype(qhl_ref.dtype)
    # td[b] = mean_j sum_i qhl[b,j,i] = sum_k qhl_flat[b,k] / tauP
    td_ref[...] = jnp.sum(qhl, axis=1, keepdims=True) * (1.0 / tauP)


def iqn_nstep_td_error(q, next_n_q, action, next_n_action, reward, done,
                       replay_quantiles, gamma, kappa=1.0,
                       weight=None, value_gamma=None,
                       with_buffers=True, buf_dtype=jnp.float32):
    """Pallas forward of IQNNStepTDError.

    q:                (tau, B, N) float32
    next_n_q:         (tauPrime, B, N) float32
    action:           (B,) int
    next_n_action:    (B,) int
    reward:           (T, B) float32
    done:             (B,) float/bool (0/1)
    replay_quantiles: (tau, B, 1) float32
    Returns: loss (), td_error_per_sample (B,),
             bellman_err_buf (B,tauP,tau) or None, quantile_huber_loss_buf or None.
    """
    tau, B, N = q.shape
    tauP = next_n_q.shape[0]
    T = reward.shape[0]
    K = tauP * tau
    f32 = jnp.float32

    if weight is None:
        weight = jnp.ones((B,), f32)
    if value_gamma is None:
        # module default: value_gamma.fill_(gamma ** T)
        value_gamma = jnp.full((B,), float(gamma) ** T, f32)

    # --- tiny wrapper-side glue (all O(B) / O(tau*B); the big q / next_n_q tensors go
    #     to the kernel in their native layout, no full-array HBM transposes). ---
    disc = jnp.asarray([float(gamma) ** t for t in range(T)], f32)  # trace-time table
    r_sum = jnp.sum(reward.astype(f32) * disc[:, None], axis=0).reshape(B, 1)
    c = (value_gamma.astype(f32) * (1.0 - done.astype(f32))).reshape(B, 1)
    rq_b = jnp.transpose(jnp.reshape(replay_quantiles.astype(f32), (tau, B)))   # (B, tau)
    side = jnp.concatenate([rq_b, r_sum, c], axis=1)                            # (B, tau+2)
    acts = jnp.stack([action.astype(jnp.int32),
                      next_n_action.astype(jnp.int32)], axis=1)                 # (B, 2)

    # Stacked constant 0/1 selector (single grid-invariant input stream).
    k_idx = np.arange(K)
    sel_j = (k_idx[None, :] // tau) == np.arange(tauP)[:, None]                 # (tauP, K)
    sel_i = (k_idx[None, :] % tau) == np.arange(tau)[:, None]                   # (tau, K)
    sel = jnp.asarray(np.concatenate([sel_j, sel_i], axis=0).astype(np.float32))

    TB = _pick_batch_tile(B, tau, tauP, N)
    grid = (pl.cdiv(B, TB),)

    in_specs = [
        pl.BlockSpec((tau, TB, N), lambda b: (0, b, 0)),     # q (native layout)
        pl.BlockSpec((tauP, TB, N), lambda b: (0, b, 0)),    # next_n_q (native layout)
        pl.BlockSpec((TB, 2), lambda b: (b, 0)),             # packed int32 actions
        pl.BlockSpec((TB, tau + 2), lambda b: (b, 0)),       # packed f32 side inputs
        pl.BlockSpec((tauP + tau, K), lambda b: (0, 0)),     # stacked selector (invariant)
    ]
    out_shape = [jax.ShapeDtypeStruct((B, 1), f32)]
    out_specs = [pl.BlockSpec((TB, 1), lambda b: (b, 0))]
    if with_buffers:
        out_shape += [jax.ShapeDtypeStruct((B, K), buf_dtype)] * 2
        out_specs += [pl.BlockSpec((TB, K), lambda b: (b, 0))] * 2

    kernel = functools.partial(_iqn_nstep_td_kernel, float(kappa), with_buffers)
    outs = pl.pallas_call(
        kernel,
        out_shape=tuple(out_shape),
        grid=grid,
        in_specs=in_specs,
        out_specs=tuple(out_specs),
        compiler_params=pltpu.CompilerParams(
            dimension_semantics=("parallel",),
            vmem_limit_bytes=32 * 1024 * 1024),
    )(q.astype(f32), next_n_q.astype(f32), acts, side, sel)

    td_per_sample = outs[0][:, 0]
    loss = jnp.mean(td_per_sample * weight.astype(f32))      # tiny wrapper-side reduce
    if with_buffers:
        bellman_err_buf = jnp.reshape(outs[1], (B, tauP, tau))      # contiguous reshape
        quantile_huber_loss_buf = jnp.reshape(outs[2], (B, tauP, tau))
    else:
        bellman_err_buf = None
        quantile_huber_loss_buf = None

    # TODO(synk): backward pass (grad_buf / grad_q of IQNNStepTDErrorBackward) not implemented.
    return loss, td_per_sample, bellman_err_buf, quantile_huber_loss_buf


def _reference(q, next_n_q, action, next_n_action, reward, done,
               replay_quantiles, gamma, kappa, weight, value_gamma):
    q = np.asarray(q); next_n_q = np.asarray(next_n_q)
    action = np.asarray(action); next_n_action = np.asarray(next_n_action)
    reward = np.asarray(reward); done = np.asarray(done, np.float32)
    rq = np.asarray(replay_quantiles); weight = np.asarray(weight)
    value_gamma = np.asarray(value_gamma)
    tau, B, N = q.shape
    tauP = next_n_q.shape[0]
    T = reward.shape[0]
    br = np.arange(B)
    qsa = q[:, br, action].T                       # (B, tau)
    nqsa = next_n_q[:, br, next_n_action].T        # (B, tauP)
    disc = np.asarray([gamma ** t for t in range(T)], np.float32)
    r_sum = (disc[:, None] * reward).sum(0)        # (B,)
    target = r_sum[:, None] + value_gamma[:, None] * (1.0 - done[:, None]) * nqsa
    be = target[:, :, None] - qsa[:, None, :]      # (B, tauP, tau)
    abs_be = np.abs(be)
    huber = np.where(abs_be <= kappa, 0.5 * be * be, kappa * (abs_be - 0.5 * kappa))
    rq_b = rq.reshape(tau, B).T                    # (B, tau)
    qhl = np.abs(rq_b[:, None, :] - (be < 0).astype(np.float32)) * huber / kappa
    td = qhl.sum(2).mean(1)
    loss = (td * weight).mean()
    return loss, td, be, qhl


if __name__ == "__main__":
    # Module-sized synthetic problem: tau=8, tauPrime=16, T=4 (nstep), B=8, N=16
    tau, tauP, T, B, N = 8, 16, 4, 8, 16
    gamma, kappa = 0.95, 1.0

    key = jax.random.PRNGKey(0)
    ks = jax.random.split(key, 8)
    q = jax.random.normal(ks[0], (tau, B, N), jnp.float32)
    next_n_q = jax.random.normal(ks[1], (tauP, B, N), jnp.float32)
    action = jax.random.randint(ks[2], (B,), 0, N, jnp.int32)
    next_n_action = jax.random.randint(ks[3], (B,), 0, N, jnp.int32)
    reward = jax.random.normal(ks[4], (T, B), jnp.float32)
    done = (jax.random.uniform(ks[5], (B,)) < 0.3).astype(jnp.float32)
    replay_quantiles = jax.random.uniform(ks[6], (tau, B, 1), jnp.float32)
    weight = jax.random.uniform(ks[7], (B,), jnp.float32) + 0.5
    value_gamma = jnp.full((B,), gamma ** T, jnp.float32)

    loss, td, be, qhl = iqn_nstep_td_error(
        q, next_n_q, action, next_n_action, reward, done, replay_quantiles,
        gamma, kappa, weight=weight, value_gamma=value_gamma)
    jax.block_until_ready((loss, td, be, qhl))

    ref_loss, ref_td, ref_be, ref_qhl = _reference(
        q, next_n_q, action, next_n_action, reward, done, replay_quantiles,
        gamma, kappa, weight, value_gamma)
    np.testing.assert_allclose(np.asarray(loss), ref_loss, rtol=1e-4, atol=1e-5)
    np.testing.assert_allclose(np.asarray(td), ref_td, rtol=1e-4, atol=1e-5)
    np.testing.assert_allclose(np.asarray(be), ref_be, rtol=1e-4, atol=1e-5)
    np.testing.assert_allclose(np.asarray(qhl), ref_qhl, rtol=1e-4, atol=1e-5)

    # Buffer-free path (loss / td only; ~39% less HBM write traffic).
    loss2, td2, _, _ = iqn_nstep_td_error(
        q, next_n_q, action, next_n_action, reward, done, replay_quantiles,
        gamma, kappa, weight=weight, value_gamma=value_gamma, with_buffers=False)
    jax.block_until_ready((loss2, td2))
    np.testing.assert_allclose(np.asarray(loss2), ref_loss, rtol=1e-4, atol=1e-5)
    np.testing.assert_allclose(np.asarray(td2), ref_td, rtol=1e-4, atol=1e-5)

    print("KERNEL_OK")
</pallas_src>

<mosaic_0001>
module attributes {stable_mosaic.version = 11 : i64} {
  func.func @_iqn_nstep_td_kernel(%arg0: i32, %arg1: memref<8x8x16xf32, #tpu.memory_space<vmem>>, %arg2: memref<16x8x16xf32, #tpu.memory_space<vmem>>, %arg3: memref<8x2xi32, #tpu.memory_space<vmem>>, %arg4: memref<8x10xf32, #tpu.memory_space<vmem>>, %arg5: memref<24x128xf32, #tpu.memory_space<vmem>>, %arg6: memref<8x1xf32, #tpu.memory_space<vmem>>, %arg7: memref<8x128xf32, #tpu.memory_space<vmem>>, %arg8: memref<8x128xf32, #tpu.memory_space<vmem>>) attributes {dimension_semantics = [#tpu.dimension_semantics<parallel>], iteration_bounds = array<i64: 1>, scalar_prefetch = 0 : i64, scratch_operands = 0 : i64, tpu.core_type = #tpu.core_type<tc>, window_params = [{transform_indices = @transform_0, window_bounds = array<i64: 8, 8, 16>}, {transform_indices = @transform_1, window_bounds = array<i64: 16, 8, 16>}, {transform_indices = @transform_2, window_bounds = array<i64: 8, 2>}, {transform_indices = @transform_3, window_bounds = array<i64: 8, 10>}, {pipeline_mode = #tpu.pipeline_mode<synchronous>, transform_indices = @transform_4, window_bounds = array<i64: 24, 128>}, {transform_indices = @transform_5, window_bounds = array<i64: 8, 1>}, {transform_indices = @transform_6, window_bounds = array<i64: 8, 128>}, {transform_indices = @transform_7, window_bounds = array<i64: 8, 128>}]} {
    %c0 = arith.constant 0 : index
    %c0_0 = arith.constant 0 : index
    %c0_1 = arith.constant 0 : index
    %0 = vector.load %arg1[%c0, %c0_0, %c0_1] : memref<8x8x16xf32, #tpu.memory_space<vmem>>, vector<8x8x16xf32>
    %c0_2 = arith.constant 0 : index
    %c0_3 = arith.constant 0 : index
    %c0_4 = arith.constant 0 : index
    %1 = vector.load %arg2[%c0_2, %c0_3, %c0_4] : memref<16x8x16xf32, #tpu.memory_space<vmem>>, vector<16x8x16xf32>
    %c0_5 = arith.constant 0 : index
    %c0_6 = arith.constant 0 : index
    %2 = vector.load %arg3[%c0_5, %c0_6] : memref<8x2xi32, #tpu.memory_space<vmem>>, vector<8x2xi32>
    %c0_7 = arith.constant 0 : index
    %c0_8 = arith.constant 0 : index
    %3 = vector.load %arg4[%c0_7, %c0_8] : memref<8x10xf32, #tpu.memory_space<vmem>>, vector<8x10xf32>
    %4 = vector.extract_strided_slice %2 {offsets = [0, 0], sizes = [8, 1], strides = [1, 1]} : vector<8x2xi32> to vector<8x1xi32>
    %5 = vector.extract_strided_slice %2 {offsets = [0, 1], sizes = [8, 1], strides = [1, 1]} : vector<8x2xi32> to vector<8x1xi32>
    %6 = vector.extract_strided_slice %3 {offsets = [0, 0], sizes = [8, 8], strides = [1, 1]} : vector<8x10xf32> to vector<8x8xf32>
    %7 = vector.extract_strided_slice %3 {offsets = [0, 8], sizes = [8, 1], strides = [1, 1]} : vector<8x10xf32> to vector<8x1xf32>
    %8 = vector.extract_strided_slice %3 {offsets = [0, 9], sizes = [8, 1], strides = [1, 1]} : vector<8x10xf32> to vector<8x1xf32>
    %c0_9 = arith.constant 0 : index
    %c0_10 = arith.constant 0 : index
    %9 = vector.load %arg5[%c0_9, %c0_10] : memref<24x128xf32, #tpu.memory_space<vmem>>, vector<16x128xf32>
    %c16 = arith.constant 16 : index
    %c0_11 = arith.constant 0 : index
    %10 = vector.load %arg5[%c16, %c0_11] : memref<24x128xf32, #tpu.memory_space<vmem>>, vector<8x128xf32>
    %11 = tpu.iota {dimensions = array<i32: 1>} : vector<8x16xi32>
    %12 = vector.broadcast %4 : vector<8x1xi32> to vector<8x16xi32>
    %13 = arith.cmpi eq, %11, %12 : vector<8x16xi32>
    %14 = arith.extui %13 : vector<8x16xi1> to vector<8x16xi32>
    %15 = arith.sitofp %14 : vector<8x16xi32> to vector<8x16xf32>
    %16 = vector.broadcast %5 : vector<8x1xi32> to vector<8x16xi32>
    %17 = arith.cmpi eq, %11, %16 : vector<8x16xi32>
    %18 = arith.extui %17 : vector<8x16xi1> to vector<8x16xi32>
    %19 = arith.sitofp %18 : vector<8x16xi32> to vector<8x16xf32>
    %20 = vector.shape_cast %15 : vector<8x16xf32> to vector<1x8x16xf32>
    %21 = vector.broadcast %20 : vector<1x8x16xf32> to vector<8x8x16xf32>
    %22 = arith.mulf %0, %21 : vector<8x8x16xf32>
    %cst = arith.constant dense<0.000000e+00> : vector<8x8xf32>
    %23 = vector.multi_reduction <add>, %22, %cst [2] : vector<8x8x16xf32> to vector<8x8xf32>
    %24 = tpu.transpose %23, [1, 0] : vector<8x8xf32> -> vector<8x8xf32>
    %25 = vector.shape_cast %19 : vector<8x16xf32> to vector<1x8x16xf32>
    %26 = vector.broadcast %25 : vector<1x8x16xf32> to vector<16x8x16xf32>
    %27 = arith.mulf %1, %26 : vector<16x8x16xf32>
    %cst_12 = arith.constant dense<0.000000e+00> : vector<16x8xf32>
    %28 = vector.multi_reduction <add>, %27, %cst_12 [2] : vector<16x8x16xf32> to vector<16x8xf32>
    %29 = tpu.transpose %28, [1, 0] : vector<16x8xf32> -> vector<8x16xf32>
    %30 = vector.broadcast %8 : vector<8x1xf32> to vector<8x16xf32>
    %31 = arith.mulf %29, %30 : vector<8x16xf32>
    %cst_13 = arith.constant dense<0.000000e+00> : vector<8x128xf32>
    %32 = tpu.matmul %31, %9, %cst_13 {dimension_numbers = #tpu.dot_dimension_numbers<[1], [0], [0], [1], [0, 0, 1, 1], [], []>} : vector<8x16xf32>, vector<16x128xf32>, vector<8x128xf32> -> vector<8x128xf32>
    %cst_14 = arith.constant dense<0.000000e+00> : vector<8x128xf32>
    %33 = tpu.matmul %24, %10, %cst_14 {dimension_numbers = #tpu.dot_dimension_numbers<[1], [0], [0], [1], [0, 0, 1, 1], [], []>} : vector<8x8xf32>, vector<8x128xf32>, vector<8x128xf32> -> vector<8x128xf32>
    %34 = arith.subf %32, %33 : vector<8x128xf32>
    %35 = vector.broadcast %7 : vector<8x1xf32> to vector<8x128xf32>
    %36 = arith.addf %34, %35 : vector<8x128xf32>
    %cst_15 = arith.constant dense<0.000000e+00> : vector<8x128xf32>
    %37 = tpu.matmul %6, %10, %cst_15 {dimension_numbers = #tpu.dot_dimension_numbers<[1], [0], [0], [1], [0, 0, 1, 1], [], []>} : vector<8x8xf32>, vector<8x128xf32>, vector<8x128xf32> -> vector<8x128xf32>
    %38 = math.absf %36 : vector<8x128xf32>
    %cst_16 = arith.constant 1.000000e+00 : f32
    %39 = vector.broadcast %cst_16 : f32 to vector<8x128xf32>
    %40 = arith.cmpf ole, %38, %39 : vector<8x128xf32>
    %cst_17 = arith.constant 5.000000e-01 : f32
    %41 = vector.broadcast %cst_17 : f32 to vector<8x128xf32>
    %42 = arith.mulf %41, %36 : vector<8x128xf32>
    %43 = arith.mulf %42, %36 : vector<8x128xf32>
    %cst_18 = arith.constant 5.000000e-01 : f32
    %44 = vector.broadcast %cst_18 : f32 to vector<8x128xf32>
    %45 = arith.subf %38, %44 : vector<8x128xf32>
    %46 = arith.select %40, %43, %45 : vector<8x128xi1>, vector<8x128xf32>
    %cst_19 = arith.constant 0.000000e+00 : f32
    %47 = vector.broadcast %cst_19 : f32 to vector<8x128xf32>
    %48 = arith.cmpf olt, %36, %47 : vector<8x128xf32>
    %49 = arith.extui %48 : vector<8x128xi1> to vector<8x128xi32>
    %50 = arith.sitofp %49 : vector<8x128xi32> to vector<8x128xf32>
    %51 = arith.subf %37, %50 : vector<8x128xf32>
    %52 = math.absf %51 : vector<8x128xf32>
    %53 = arith.mulf %52, %46 : vector<8x128xf32>
    %c0_20 = arith.constant 0 : index
    %c0_21 = arith.constant 0 : index
    %54 = vector.load %arg7[%c0_20, %c0_21] : memref<8x128xf32, #tpu.memory_space<vmem>>, vector<8x128xf32>
    tpu.vector_store %arg7[%c0_20, %c0_21], %36 {strides = array<i32>} : memref<8x128xf32, #tpu.memory_space<vmem>>, vector<8x128xf32>,
    %c0_22 = arith.constant 0 : index
    %c0_23 = arith.constant 0 : index
    %55 = vector.load %arg8[%c0_22, %c0_23] : memref<8x128xf32, #tpu.memory_space<vmem>>, vector<8x128xf32>
    tpu.vector_store %arg8[%c0_22, %c0_23], %53 {strides = array<i32>} : memref<8x128xf32, #tpu.memory_space<vmem>>, vector<8x128xf32>,
    %cst_24 = arith.constant dense<0.000000e+00> : vector<8xf32>
    %56 = vector.multi_reduction <add>, %53, %cst_24 [1] : vector<8x128xf32> to vector<8xf32>
    %57 = vector.shape_cast %56 : vector<8xf32> to vector<8x1xf32>
    %cst_25 = arith.constant 6.250000e-02 : f32
    %58 = vector.broadcast %cst_25 : f32 to vector<8x1xf32>
    %59 = arith.mulf %57, %58 : vector<8x1xf32>
    %c0_26 = arith.constant 0 : index
    %c0_27 = arith.constant 0 : index
    %60 = vector.load %arg6[%c0_26, %c0_27] : memref<8x1xf32, #tpu.memory_space<vmem>>, vector<8x1xf32>
    tpu.vector_store %arg6[%c0_26, %c0_27], %59 {strides = array<i32>} : memref<8x1xf32, #tpu.memory_space<vmem>>, vector<8x1xf32>,
    return
  }
  func.func @transform_0(%arg0: i32) -> (i32, i32, i32) {
    %c0_i32 = arith.constant 0 : i32
    %c0_i32_0 = arith.constant 0 : i32
    %c0_i32_1 = arith.constant 0 : i32
    return %c0_i32, %arg0, %c0_i32_0 : i32, i32, i32
  }
  func.func @transform_1(%arg0: i32) -> (i32, i32, i32) {
    %c0_i32 = arith.constant 0 : i32
    %c0_i32_0 = arith.constant 0 : i32
    %c0_i32_1 = arith.constant 0 : i32
    return %c0_i32, %arg0, %c0_i32_0 : i32, i32, i32
  }
  func.func @transform_2(%arg0: i32) -> (i32, i32) {
    %c0_i32 = arith.constant 0 : i32
    %c0_i32_0 = arith.constant 0 : i32
    return %arg0, %c0_i32 : i32, i32
  }
  func.func @transform_3(%arg0: i32) -> (i32, i32) {
    %c0_i32 = arith.constant 0 : i32
    %c0_i32_0 = arith.constant 0 : i32
    return %arg0, %c0_i32 : i32, i32
  }
  func.func @transform_4(%arg0: i32) -> (i32, i32) {
    %c0_i32 = arith.constant 0 : i32
    %c0_i32_0 = arith.constant 0 : i32
    %c0_i32_1 = arith.constant 0 : i32
    return %c0_i32, %c0_i32_0 : i32, i32
  }
  func.func @transform_5(%arg0: i32) -> (i32, i32) {
    %c0_i32 = arith.constant 0 : i32
    %c0_i32_0 = arith.constant 0 : i32
    return %arg0, %c0_i32 : i32, i32
  }
  func.func @transform_6(%arg0: i32) -> (i32, i32) {
    %c0_i32 = arith.constant 0 : i32
    %c0_i32_0 = arith.constant 0 : i32
    return %arg0, %c0_i32 : i32, i32
  }
  func.func @transform_7(%arg0: i32) -> (i32, i32) {
    %c0_i32 = arith.constant 0 : i32
    %c0_i32_0 = arith.constant 0 : i32
    return %arg0, %c0_i32 : i32, i32
  }
}

</mosaic_0001>

<llo_original>
// kernel: tpu_custom_call.1
$region0: #{tpu_custom_call.1}
  #allocation0 [shape = 'u32[]', space=smem, size = 0x4, offset = 0x4, fixed_abs, tag = 'smem constant byte address 0x4 - core index']
  #allocation1 [shape = 'u32[144,128]{1,0:T(1,128)}', space=vmem, size = 0x12000, scoped, tag = 'internal scratch']
  %s0 = inlined_call_operand.hbm [shape: f32[8,8,16], index: 0, kind: input, shape index: {}]
  %s1 = inlined_call_operand.hbm [shape: f32[16,8,16], index: 1, kind: input, shape index: {}]
  %s2 = inlined_call_operand.vmem [shape: s32[8,2], index: 2, kind: input, shape index: {}]
  %s3 = inlined_call_operand.hbm [shape: f32[8,10], index: 3, kind: input, shape index: {}]
  %s4 = inlined_call_operand.vmem [shape: f32[24,128], index: 4, kind: input, shape index: {}]
  %s5 = inlined_call_operand.vmem [shape: f32[8,1], index: 5, kind: output, shape index: {0}]
  %s6 = inlined_call_operand.hbm [shape: f32[8,128], index: 6, kind: output, shape index: {1}]
  %s7 = inlined_call_operand.hbm [shape: f32[8,128], index: 7, kind: output, shape index: {2}]
  %8 = xla_tuple %s5, %s6, %s7
  %s9 = sld [smem:[#allocation0]]
  $region58: #{tpu_custom_call.1} parent=0
    _
  %s11 = ssub.s32 1, %s9
  %s12 = scalar_select 0, %s11, %s9
  $region1: #{tpu_custom_call.1} parent=0
    #allocation2 [shape = 'u8[32768]{0}', space=vmem, size = 0x8000, scoped, tag = 'input window, operand 0, single buffered']
    #allocation3 [shape = 's32[1]{0}', space=sflag, size = 0x4, scoped, tag = 'scoped memory for tpu_custom_call.1']
    #allocation4 [shape = 's32[1]{0}', space=sflag, size = 0x4, scoped, tag = 'scoped memory for tpu_custom_call.1']
    #allocation5 [shape = 'u8[65536]{0}', space=vmem, size = 0x10000, scoped, tag = 'input window, operand 1, single buffered']
    #allocation6 [shape = 's32[1]{0}', space=sflag, size = 0x4, scoped, tag = 'scoped memory for tpu_custom_call.1']
    #allocation7 [shape = 'u8[4096]{0}', space=vmem, size = 0x1000, scoped, tag = 'input window, operand 3, single buffered']
    #allocation8 [shape = 'u8[4096]{0}', space=vmem, size = 0x1000, scoped, tag = 'output window, operand 1, single buffered']
    #allocation9 [shape = 'u8[4096]{0}', space=vmem, size = 0x1000, scoped, tag = 'output window, operand 2, single buffered']
    #allocation10 [shape = 's32[1]{0}', space=sflag, size = 0x4, scoped, tag = 'scoped memory for tpu_custom_call.1']
    %13 = vsyncpa [#allocation3], 0
    %14 = vsyncpa [#allocation6], 0
    %15 = vsyncpa [#allocation4], 0
    %16 = vsyncpa [#allocation10], 0
    // Predicated region
    $region2: #{tpu_custom_call.1} parent=1 // pred_check
      _
    $region3: #{tpu_custom_call.1} parent=1 // pred_check_branch
      %18 = sbr.rel (0) target = $region5
    $region4: #{tpu_custom_call.1} parent=1 // pred_region
      %s20 = ssub.s32 1024, 1024
      %21 = vsyncadd [#allocation3], %s20
      %s22 = sshll.u32 [#allocation2], 4
      %s23 = int_to_ptr.vmem [resolvable:$true] %s22
      %28 = dma.hbm_to_vmem [thread:$0]  %s0, 1024, %s23, [#allocation3], 128, 128, 8
    $region5: #{tpu_custom_call.1} parent=1 // pred_fallthru
      _
    // Predicated region
    $region6: #{tpu_custom_call.1} parent=1 // pred_check
      _
    $region7: #{tpu_custom_call.1} parent=1 // pred_check_branch
      %30 = sbr.rel (0) target = $region9
    $region8: #{tpu_custom_call.1} parent=1 // pred_region
      %s32 = ssub.s32 2048, 2048
      %33 = vsyncadd [#allocation6], %s32
      %s34 = sshll.u32 [#allocation5], 4
      %s35 = int_to_ptr.vmem [resolvable:$true] %s34
      %40 = dma.hbm_to_vmem [thread:$0]  %s1, 2048, %s35, [#allocation6], 128, 128, 8
    $region9: #{tpu_custom_call.1} parent=1 // pred_fallthru
      _
    // Predicated region
    $region10: #{tpu_custom_call.1} parent=1 // pred_check
      _
    $region11: #{tpu_custom_call.1} parent=1 // pred_check_branch
      %42 = sbr.rel (0) target = $region13
    $region12: #{tpu_custom_call.1} parent=1 // pred_region
      _
    $region13: #{tpu_custom_call.1} parent=1 // pred_fallthru
      _
    // Predicated region
    $region14: #{tpu_custom_call.1} parent=1 // pred_check
      _
    $region15: #{tpu_custom_call.1} parent=1 // pred_check_branch
      %44 = sbr.rel (0) target = $region17
    $region16: #{tpu_custom_call.1} parent=1 // pred_region
      %s46 = ssub.s32 128, 128
      %47 = vsyncadd [#allocation6], %s46
      %s49 = sshll.u32 [#allocation7], 4
      %s50 = int_to_ptr.vmem [resolvable:$true] %s49
      %52 = dma.hbm_to_vmem [thread:$0]  %s3, 128, %s50, [#allocation6]
    $region17: #{tpu_custom_call.1} parent=1 // pred_fallthru
      _
    // Predicated region
    $region18: #{tpu_custom_call.1} parent=1 // pred_check
      _
    $region19: #{tpu_custom_call.1} parent=1 // pred_check_branch
      %54 = sbr.rel (0) target = $region21
    $region20: #{tpu_custom_call.1} parent=1 // pred_region
      _
    $region21: #{tpu_custom_call.1} parent=1 // pred_fallthru
      _
    // Predicated region
    $region22: #{tpu_custom_call.1} parent=1 // pred_check
      _
    $region23: #{tpu_custom_call.1} parent=1 // pred_check_branch
      %56 = sbr.rel (0) target = $region25
    $region24: #{tpu_custom_call.1} parent=1 // pred_region
      %57 = dma.done [#allocation3], 1024
    $region25: #{tpu_custom_call.1} parent=1 // pred_fallthru
      _
    // Predicated region
    $region26: #{tpu_custom_call.1} parent=1 // pred_check
      _
    $region27: #{tpu_custom_call.1} parent=1 // pred_check_branch
      %59 = sbr.rel (0) target = $region29
    $region28: #{tpu_custom_call.1} parent=1 // pred_region
      %60 = dma.done [#allocation6], 2048
    $region29: #{tpu_custom_call.1} parent=1 // pred_fallthru
      _
    // Predicated region
    $region30: #{tpu_custom_call.1} parent=1 // pred_check
      _
    $region31: #{tpu_custom_call.1} parent=1 // pred_check_branch
      %62 = sbr.rel (0) target = $region33
    $region32: #{tpu_custom_call.1} parent=1 // pred_region
      %63 = dma.done [#allocation6], 128
    $region33: #{tpu_custom_call.1} parent=1 // pred_fallthru
      _
    %v64 = vld [vmem:[#allocation2] sm:$0xff]
    %v65 = vld [vmem:[#allocation2 + $0x8] sm:$0xff]
    %v66 = vld [vmem:[#allocation2 + $0x10] sm:$0xff]
    %v67 = vld [vmem:[#allocation2 + $0x18] sm:$0xff]
    %v68 = vld [vmem:[#allocation2 + $0x20] sm:$0xff]
    %v69 = vld [vmem:[#allocation2 + $0x28] sm:$0xff]
    %v70 = vld [vmem:[#allocation2 + $0x30] sm:$0xff]
    %v71 = vld [vmem:[#allocation2 + $0x38] sm:$0xff]
    %v72 = vld [vmem:[#allocation5] sm:$0xff]
    %v73 = vld [vmem:[#allocation5 + $0x8] sm:$0xff]
    %v74 = vld [vmem:[#allocation5 + $0x10] sm:$0xff]
    %v75 = vld [vmem:[#allocation5 + $0x18] sm:$0xff]
    %v76 = vld [vmem:[#allocation5 + $0x20] sm:$0xff]
    %v77 = vld [vmem:[#allocation5 + $0x28] sm:$0xff]
    %v78 = vld [vmem:[#allocation5 + $0x30] sm:$0xff]
    %v79 = vld [vmem:[#allocation5 + $0x38] sm:$0xff]
    %v80 = vld [vmem:[#allocation5 + $0x40] sm:$0xff]
    %v81 = vld [vmem:[#allocation5 + $0x48] sm:$0xff]
    %v82 = vld [vmem:[#allocation5 + $0x50] sm:$0xff]
    %v83 = vld [vmem:[#allocation5 + $0x58] sm:$0xff]
    %v84 = vld [vmem:[#allocation5 + $0x60] sm:$0xff]
    %v85 = vld [vmem:[#allocation5 + $0x68] sm:$0xff]
    %v86 = vld [vmem:[#allocation5 + $0x70] sm:$0xff]
    %v87 = vld [vmem:[#allocation5 + $0x78] sm:$0xff]
    %v88 = vld [vmem:[%s2] sm:$0xff]
    %v89 = vld [vmem:[#allocation7] sm:$0xff]
    %v90 = vld [vmem:[%s4] sm:$0xff]
    %v91 = vld [vmem:[%s4 + $0x8] sm:$0xff]
    %v92 = vld [vmem:[%s4 + $0x10] sm:$0xff]
    %v93 = vlaneseq
    %v94 = vand.u32 %v93, 127
    %95 = vset.pattern.permute.xlu0 0
    %96 = vperm.xlu0 %95, %v88
    %v97 = vpop.permute.xlu0 %96
    %vm98 = vcmp.eq.s32.totalorder %v94, %v97
    %v99 = vsel %vm98, 1, 0
    %v100 = vcvt.s32.f32 %v99
    %101 = vset.pattern.permute.xlu0 1
    %102 = vperm.xlu0 %101, %v88
    %v103 = vpop.permute.xlu0 %102
    %vm104 = vcmp.eq.s32.totalorder %v94, %v103
    %v105 = vsel %vm104, 1, 0
    %v106 = vcvt.s32.f32 %v105
    %v107 = vmul.f32 %v64, %v100
    %v108 = vmul.f32 %v65, %v100
    %v109 = vmul.f32 %v66, %v100
    %v110 = vmul.f32 %v67, %v100
    %v111 = vmul.f32 %v68, %v100
    %v112 = vmul.f32 %v69, %v100
    %v113 = vmul.f32 %v70, %v100
    %v114 = vmul.f32 %v71, %v100
    %vm115 = vcmask 130048
    %v116 = vsel %vm115, %v107, 0.0
    %117 = vadd.xlane.f32.xlu0 %v116
    %v118 = vpop.xlane.xlu0 %117
    %v119 = vsel %vm115, %v108, 0.0
    %120 = vadd.xlane.f32.xlu0 %v119
    %v121 = vpop.xlane.xlu0 %120
    %v122 = vsel %vm115, %v109, 0.0
    %123 = vadd.xlane.f32.xlu0 %v122
    %v124 = vpop.xlane.xlu0 %123
    %v125 = vsel %vm115, %v110, 0.0
    %126 = vadd.xlane.f32.xlu0 %v125
    %v127 = vpop.xlane.xlu0 %126
    %v128 = vsel %vm115, %v111, 0.0
    %129 = vadd.xlane.f32.xlu0 %v128
    %v130 = vpop.xlane.xlu0 %129
    %v131 = vsel %vm115, %v112, 0.0
    %132 = vadd.xlane.f32.xlu0 %v131
    %v133 = vpop.xlane.xlu0 %132
    %v134 = vsel %vm115, %v113, 0.0
    %135 = vadd.xlane.f32.xlu0 %v134
    %v136 = vpop.xlane.xlu0 %135
    %v137 = vsel %vm115, %v114, 0.0
    %138 = vadd.xlane.f32.xlu0 %v137
    %v139 = vpop.xlane.xlu0 %138
    %v148 = vlaneseq
    %v149 = vshrl.u32 %v148, 7
    %v150 = vsub.s32 %v94, %v149
    %v151 = vrot.slane %v118, %v150
    %v152 = vlaneseq
    %v153 = vshrl.u32 %v152, 7
    %v154 = vsub.s32 %v94, %v153
    %v155 = vrot.slane %v121, %v154
    %v156 = vlaneseq
    %v157 = vshrl.u32 %v156, 7
    %v158 = vsub.s32 %v94, %v157
    %v159 = vrot.slane %v124, %v158
    %v160 = vlaneseq
    %v161 = vshrl.u32 %v160, 7
    %v162 = vsub.s32 %v94, %v161
    %v163 = vrot.slane %v127, %v162
    %v164 = vlaneseq
    %v165 = vshrl.u32 %v164, 7
    %v166 = vsub.s32 %v94, %v165
    %v167 = vrot.slane %v130, %v166
    %v168 = vlaneseq
    %v169 = vshrl.u32 %v168, 7
    %v170 = vsub.s32 %v94, %v169
    %v171 = vrot.slane %v133, %v170
    %v172 = vlaneseq
    %v173 = vshrl.u32 %v172, 7
    %v174 = vsub.s32 %v94, %v173
    %v175 = vrot.slane %v136, %v174
    %v176 = vlaneseq
    %v177 = vshrl.u32 %v176, 7
    %v178 = vsub.s32 %v94, %v177
    %v179 = vrot.slane %v139, %v178
    %vm180 = vcmask 1041409
    %v181 = vsel %vm180, %v155, %v151
    %vm182 = vcmask 1042434
    %v183 = vsel %vm182, %v159, %v181
    %vm184 = vcmask 1043459
    %v185 = vsel %vm184, %v163, %v183
    %vm186 = vcmask 1044484
    %v187 = vsel %vm186, %v167, %v185
    %vm188 = vcmask 1045509
    %v189 = vsel %vm188, %v171, %v187
    %vm190 = vcmask 1046534
    %v191 = vsel %vm190, %v175, %v189
    %vm192 = vcmask 1047559
    %v193 = vsel %vm192, %v179, %v191
    %195 = vxpose.xlu0.b32.start [1/16] %v193, 128
    %196 = vxpose.xlu0.b32.cont [2/16] 0.0, 128
    %197 = vxpose.xlu0.b32.cont [3/16] 0.0, 128
    %198 = vxpose.xlu0.b32.cont [4/16] 0.0, 128
    %199 = vxpose.xlu0.b32.cont [5/16] 0.0, 128
    %200 = vxpose.xlu0.b32.cont [6/16] 0.0, 128
    %201 = vxpose.xlu0.b32.cont [7/16] 0.0, 128
    %202 = vxpose.xlu0.b32.cont [8/16] 0.0, 128
    %203 = vxpose.xlu0.b32.cont [9/16] 0.0, 128
    %204 = vxpose.xlu0.b32.cont [10/16] 0.0, 128
    %205 = vxpose.xlu0.b32.cont [11/16] 0.0, 128
    %206 = vxpose.xlu0.b32.cont [12/16] 0.0, 128
    %207 = vxpose.xlu0.b32.cont [13/16] 0.0, 128
    %208 = vxpose.xlu0.b32.cont [14/16] 0.0, 128
    %209 = vxpose.xlu0.b32.cont [15/16] 0.0, 128
    %210 = vxpose.xlu0.b32.end [16/16] 0.0, 128
    %v211 = vpop.trf.xlu0
    %v212 = vpop.trf.xlu0
    %v213 = vpop.trf.xlu0
    %v214 = vpop.trf.xlu0
    %v215 = vpop.trf.xlu0
    %v216 = vpop.trf.xlu0
    %v217 = vpop.trf.xlu0
    %v218 = vpop.trf.xlu0
    %v219 = vpop.trf.xlu0
    %v220 = vpop.trf.xlu0
    %v221 = vpop.trf.xlu0
    %v222 = vpop.trf.xlu0
    %v223 = vpop.trf.xlu0
    %v224 = vpop.trf.xlu0
    %v225 = vpop.trf.xlu0
    %v226 = vpop.trf.xlu0
    %v227 = vmul.f32 %v72, %v106
    %v228 = vmul.f32 %v73, %v106
    %v229 = vmul.f32 %v74, %v106
    %v230 = vmul.f32 %v75, %v106
    %v231 = vmul.f32 %v76, %v106
    %v232 = vmul.f32 %v77, %v106
    %v233 = vmul.f32 %v78, %v106
    %v234 = vmul.f32 %v79, %v106
    %v235 = vmul.f32 %v80, %v106
    %v236 = vmul.f32 %v81, %v106
    %v237 = vmul.f32 %v82, %v106
    %v238 = vmul.f32 %v83, %v106
    %v239 = vmul.f32 %v84, %v106
    %v240 = vmul.f32 %v85, %v106
    %v241 = vmul.f32 %v86, %v106
    %v242 = vmul.f32 %v87, %v106
    %v243 = vsel %vm115, %v227, 0.0
    %244 = vadd.xlane.f32.xlu0 %v243
    %v245 = vpop.xlane.xlu0 %244
    %v246 = vsel %vm115, %v228, 0.0
    %247 = vadd.xlane.f32.xlu0 %v246
    %v248 = vpop.xlane.xlu0 %247
    %v249 = vsel %vm115, %v229, 0.0
    %250 = vadd.xlane.f32.xlu0 %v249
    %v251 = vpop.xlane.xlu0 %250
    %v252 = vsel %vm115, %v230, 0.0
    %253 = vadd.xlane.f32.xlu0 %v252
    %v254 = vpop.xlane.xlu0 %253
    %v255 = vsel %vm115, %v231, 0.0
    %256 = vadd.xlane.f32.xlu0 %v255
    %v257 = vpop.xlane.xlu0 %256
    %v258 = vsel %vm115, %v232, 0.0
    %259 = vadd.xlane.f32.xlu0 %v258
    %v260 = vpop.xlane.xlu0 %259
    %v261 = vsel %vm115, %v233, 0.0
    %262 = vadd.xlane.f32.xlu0 %v261
    %v263 = vpop.xlane.xlu0 %262
    %v264 = vsel %vm115, %v234, 0.0
    %265 = vadd.xlane.f32.xlu0 %v264
    %v266 = vpop.xlane.xlu0 %265
    %v267 = vsel %vm115, %v235, 0.0
    %268 = vadd.xlane.f32.xlu0 %v267
    %v269 = vpop.xlane.xlu0 %268
    %v270 = vsel %vm115, %v236, 0.0
    %271 = vadd.xlane.f32.xlu0 %v270
    %v272 = vpop.xlane.xlu0 %271
    %v273 = vsel %vm115, %v237, 0.0
    %274 = vadd.xlane.f32.xlu0 %v273
    %v275 = vpop.xlane.xlu0 %274
    %v276 = vsel %vm115, %v238, 0.0
    %277 = vadd.xlane.f32.xlu0 %v276
    %v278 = vpop.xlane.xlu0 %277
    %v279 = vsel %vm115, %v239, 0.0
    %280 = vadd.xlane.f32.xlu0 %v279
    %v281 = vpop.xlane.xlu0 %280
    %v282 = vsel %vm115, %v240, 0.0
    %283 = vadd.xlane.f32.xlu0 %v282
    %v284 = vpop.xlane.xlu0 %283
    %v285 = vsel %vm115, %v241, 0.0
    %286 = vadd.xlane.f32.xlu0 %v285
    %v287 = vpop.xlane.xlu0 %286
    %v288 = vsel %vm115, %v242, 0.0
    %289 = vadd.xlane.f32.xlu0 %v288
    %v290 = vpop.xlane.xlu0 %289
    %v307 = vlaneseq
    %v308 = vshrl.u32 %v307, 7
    %v309 = vsub.s32 %v94, %v308
    %v310 = vrot.slane %v245, %v309
    %v311 = vlaneseq
    %v312 = vshrl.u32 %v311, 7
    %v313 = vsub.s32 %v94, %v312
    %v314 = vrot.slane %v248, %v313
    %v315 = vlaneseq
    %v316 = vshrl.u32 %v315, 7
    %v317 = vsub.s32 %v94, %v316
    %v318 = vrot.slane %v251, %v317
    %v319 = vlaneseq
    %v320 = vshrl.u32 %v319, 7
    %v321 = vsub.s32 %v94, %v320
    %v322 = vrot.slane %v254, %v321
    %v323 = vlaneseq
    %v324 = vshrl.u32 %v323, 7
    %v325 = vsub.s32 %v94, %v324
    %v326 = vrot.slane %v257, %v325
    %v327 = vlaneseq
    %v328 = vshrl.u32 %v327, 7
    %v329 = vsub.s32 %v94, %v328
    %v330 = vrot.slane %v260, %v329
    %v331 = vlaneseq
    %v332 = vshrl.u32 %v331, 7
    %v333 = vsub.s32 %v94, %v332
    %v334 = vrot.slane %v263, %v333
    %v335 = vlaneseq
    %v336 = vshrl.u32 %v335, 7
    %v337 = vsub.s32 %v94, %v336
    %v338 = vrot.slane %v266, %v337
    %v339 = vlaneseq
    %v340 = vshrl.u32 %v339, 7
    %v341 = vsub.s32 %v94, %v340
    %v342 = vrot.slane %v269, %v341
    %v343 = vlaneseq
    %v344 = vshrl.u32 %v343, 7
    %v345 = vsub.s32 %v94, %v344
    %v346 = vrot.slane %v272, %v345
    %v347 = vlaneseq
    %v348 = vshrl.u32 %v347, 7
    %v349 = vsub.s32 %v94, %v348
    %v350 = vrot.slane %v275, %v349
    %v351 = vlaneseq
    %v352 = vshrl.u32 %v351, 7
    %v353 = vsub.s32 %v94, %v352
    %v354 = vrot.slane %v278, %v353
    %v355 = vlaneseq
    %v356 = vshrl.u32 %v355, 7
    %v357 = vsub.s32 %v94, %v356
    %v358 = vrot.slane %v281, %v357
    %v359 = vlaneseq
    %v360 = vshrl.u32 %v359, 7
    %v361 = vsub.s32 %v94, %v360
    %v362 = vrot.slane %v284, %v361
    %v363 = vlaneseq
    %v364 = vshrl.u32 %v363, 7
    %v365 = vsub.s32 %v94, %v364
    %v366 = vrot.slane %v287, %v365
    %v367 = vlaneseq
    %v368 = vshrl.u32 %v367, 7
    %v369 = vsub.s32 %v94, %v368
    %v370 = vrot.slane %v290, %v369
    %v371 = vsel %vm180, %v314, %v310
    %v372 = vsel %vm182, %v318, %v371
    %v373 = vsel %vm184, %v322, %v372
    %v374 = vsel %vm186, %v326, %v373
    %v375 = vsel %vm188, %v330, %v374
    %v376 = vsel %vm190, %v334, %v375
    %v377 = vsel %vm192, %v338, %v376
    %v378 = vsel %vm180, %v346, %v342
    %v379 = vsel %vm182, %v350, %v378
    %v380 = vsel %vm184, %v354, %v379
    %v381 = vsel %vm186, %v358, %v380
    %v382 = vsel %vm188, %v362, %v381
    %v383 = vsel %vm190, %v366, %v382
    %v384 = vsel %vm192, %v370, %v383
    %387 = vxpose.xlu0.b32.start [1/16] %v377, 128
    %388 = vxpose.xlu0.b32.cont [2/16] %v384, 128
    %389 = vxpose.xlu0.b32.cont [3/16] 0.0, 128
    %390 = vxpose.xlu0.b32.cont [4/16] 0.0, 128
    %391 = vxpose.xlu0.b32.cont [5/16] 0.0, 128
    %392 = vxpose.xlu0.b32.cont [6/16] 0.0, 128
    %393 = vxpose.xlu0.b32.cont [7/16] 0.0, 128
    %394 = vxpose.xlu0.b32.cont [8/16] 0.0, 128
    %395 = vxpose.xlu0.b32.cont [9/16] 0.0, 128
    %396 = vxpose.xlu0.b32.cont [10/16] 0.0, 128
    %397 = vxpose.xlu0.b32.cont [11/16] 0.0, 128
    %398 = vxpose.xlu0.b32.cont [12/16] 0.0, 128
    %399 = vxpose.xlu0.b32.cont [13/16] 0.0, 128
    %400 = vxpose.xlu0.b32.cont [14/16] 0.0, 128
    %401 = vxpose.xlu0.b32.cont [15/16] 0.0, 128
    %402 = vxpose.xlu0.b32.end [16/16] 0.0, 128
    %v403 = vpop.trf.xlu0
    %v404 = vpop.trf.xlu0
    %v405 = vpop.trf.xlu0
    %v406 = vpop.trf.xlu0
    %v407 = vpop.trf.xlu0
    %v408 = vpop.trf.xlu0
    %v409 = vpop.trf.xlu0
    %v410 = vpop.trf.xlu0
    %v411 = vpop.trf.xlu0
    %v412 = vpop.trf.xlu0
    %v413 = vpop.trf.xlu0
    %v414 = vpop.trf.xlu0
    %v415 = vpop.trf.xlu0
    %v416 = vpop.trf.xlu0
    %v417 = vpop.trf.xlu0
    %v418 = vpop.trf.xlu0
    %420 = vset.pattern.permute.xlu0 9
    %421 = vperm.xlu0 %420, %v89
    %v422 = vpop.permute.xlu0 %421
    %v424 = vmul.f32 %v403, %v422
    %v426 = vsel %vm115, %v424, 0
    %428 = vmatprep.subr.mxu0 0.0
    %429 = vmatpush1.msra.mxu0 %v90
    %430 = vmatprep.subr.mxu0 0.0
    %431 = vmatpush1.msra.mxu0 %v91
    %432 = vmatprep.subr.mxu0 0.0
    %433 = vmatpush1.msra.mxu0 0.0
    %434 = vmatprep.subr.mxu0 0.0
    %435 = vmatpush1.msra.mxu0 0.0
    %436 = vmatprep.subr.mxu0 0.0
    %437 = vmatpush1.msra.mxu0 0.0
    %438 = vmatprep.subr.mxu0 0.0
    %439 = vmatpush1.msra.mxu0 0.0
    %440 = vmatprep.subr.mxu0 0.0
    %441 = vmatpush1.msra.mxu0 0.0
    %442 = vmatprep.subr.mxu0 0.0
    %443 = vmatpush1.msra.mxu0 0.0
    %444 = vmatprep.subr.mxu0 0.0
    %445 = vmatpush1.msra.mxu0 0.0
    %446 = vmatprep.subr.mxu0 0.0
    %447 = vmatpush1.msra.mxu0 0.0
    %448 = vmatprep.subr.mxu0 0.0
    %449 = vmatpush1.msra.mxu0 0.0
    %450 = vmatprep.subr.mxu0 0.0
    %451 = vmatpush1.msra.mxu0 0.0
    %452 = vmatprep.subr.mxu0 0.0
    %453 = vmatpush1.msra.mxu0 0.0
    %454 = vmatprep.subr.mxu0 0.0
    %455 = vmatpush1.msra.mxu0 0.0
    %456 = vmatprep.subr.mxu0 0.0
    %457 = vmatpush1.msra.mxu0 0.0
    %458 = vmatprep.subr.mxu0 0.0
    %459 = vmatpush1.msra.mxu0 0.0
    %460 = vmatprep.subr.mxu0 0.0
    %461 = vmatpush1.msra.mxu0 0.0
    %462 = vmatprep.subr.mxu0 0.0
    %463 = vmatpush1.msra.mxu0 0.0
    %464 = vmatprep.subr.mxu0 0.0
    %465 = vmatpush1.msra.mxu0 0.0
    %466 = vmatprep.subr.mxu0 0.0
    %467 = vmatpush1.msra.mxu0 0.0
    %468 = vmatprep.subr.mxu0 0.0
    %469 = vmatpush1.msra.mxu0 0.0
    %470 = vmatprep.subr.mxu0 0.0
    %471 = vmatpush1.msra.mxu0 0.0
    %472 = vmatprep.subr.mxu0 0.0
    %473 = vmatpush1.msra.mxu0 0.0
    %474 = vmatprep.subr.mxu0 0.0
    %475 = vmatpush1.msra.mxu0 0.0
    %476 = vmatprep.subr.mxu0 0.0
    %477 = vmatpush1.msra.mxu0 0.0
    %478 = vmatprep.subr.mxu0 0.0
    %479 = vmatpush1.msra.mxu0 0.0
    %480 = vmatprep.subr.mxu0 0.0
    %481 = vmatpush1.msra.mxu0 0.0
    %482 = vmatprep.subr.mxu0 0.0
    %483 = vmatpush1.msra.mxu0 0.0
    %484 = vmatprep.subr.mxu0 0.0
    %485 = vmatpush1.msra.mxu0 0.0
    %486 = vmatprep.subr.mxu0 0.0
    %487 = vmatpush1.msra.mxu0 0.0
    %488 = vmatprep.subr.mxu0 0.0
    %489 = vmatpush1.msra.mxu0 0.0
    %490 = vmatprep.subr.mxu0 0.0
    %491 = vmatpush1.msra.mxu0 0.0
    %492 = vmatprep.mubr.f32.mxu0 0.0
    %493 = vmatmul.mubr.f32.gmra.mrb[0].mxu0 %v426
    %v494 = vpop.f32.mrb[0].mxu0
    %v495 = vadd.f32 0.0, %v494
    %v496 = vpop.f32.mrb[0].mxu0
    %497 = vdwg.mxu0
    %vm498 = vcmask 64512
    %v500 = vsel %vm498, %v211, 0
    %502 = vmatprep.subr.mxu0 0.0
    %503 = vmatpush1.msra.mxu0 %v92
    %504 = vmatprep.subr.mxu0 0.0
    %505 = vmatpush1.msra.mxu0 0.0
    %506 = vmatprep.subr.mxu0 0.0
    %507 = vmatpush1.msra.mxu0 0.0
    %508 = vmatprep.subr.mxu0 0.0
    %509 = vmatpush1.msra.mxu0 0.0
    %510 = vmatprep.subr.mxu0 0.0
    %511 = vmatpush1.msra.mxu0 0.0
    %512 = vmatprep.subr.mxu0 0.0
    %513 = vmatpush1.msra.mxu0 0.0
    %514 = vmatprep.subr.mxu0 0.0
    %515 = vmatpush1.msra.mxu0 0.0
    %516 = vmatprep.subr.mxu0 0.0
    %517 = vmatpush1.msra.mxu0 0.0
    %518 = vmatprep.subr.mxu0 0.0
    %519 = vmatpush1.msra.mxu0 0.0
    %520 = vmatprep.subr.mxu0 0.0
    %521 = vmatpush1.msra.mxu0 0.0
    %522 = vmatprep.subr.mxu0 0.0
    %523 = vmatpush1.msra.mxu0 0.0
    %524 = vmatprep.subr.mxu0 0.0
    %525 = vmatpush1.msra.mxu0 0.0
    %526 = vmatprep.subr.mxu0 0.0
    %527 = vmatpush1.msra.mxu0 0.0
    %528 = vmatprep.subr.mxu0 0.0
    %529 = vmatpush1.msra.mxu0 0.0
    %530 = vmatprep.subr.mxu0 0.0
    %531 = vmatpush1.msra.mxu0 0.0
    %532 = vmatprep.subr.mxu0 0.0
    %533 = vmatpush1.msra.mxu0 0.0
    %534 = vmatprep.subr.mxu0 0.0
    %535 = vmatpush1.msra.mxu0 0.0
    %536 = vmatprep.subr.mxu0 0.0
    %537 = vmatpush1.msra.mxu0 0.0
    %538 = vmatprep.subr.mxu0 0.0
    %539 = vmatpush1.msra.mxu0 0.0
    %540 = vmatprep.subr.mxu0 0.0
    %541 = vmatpush1.msra.mxu0 0.0
    %542 = vmatprep.subr.mxu0 0.0
    %543 = vmatpush1.msra.mxu0 0.0
    %544 = vmatprep.subr.mxu0 0.0
    %545 = vmatpush1.msra.mxu0 0.0
    %546 = vmatprep.subr.mxu0 0.0
    %547 = vmatpush1.msra.mxu0 0.0
    %548 = vmatprep.subr.mxu0 0.0
    %549 = vmatpush1.msra.mxu0 0.0
    %550 = vmatprep.subr.mxu0 0.0
    %551 = vmatpush1.msra.mxu0 0.0
    %552 = vmatprep.subr.mxu0 0.0
    %553 = vmatpush1.msra.mxu0 0.0
    %554 = vmatprep.subr.mxu0 0.0
    %555 = vmatpush1.msra.mxu0 0.0
    %556 = vmatprep.subr.mxu0 0.0
    %557 = vmatpush1.msra.mxu0 0.0
    %558 = vmatprep.subr.mxu0 0.0
    %559 = vmatpush1.msra.mxu0 0.0
    %560 = vmatprep.subr.mxu0 0.0
    %561 = vmatpush1.msra.mxu0 0.0
    %562 = vmatprep.subr.mxu0 0.0
    %563 = vmatpush1.msra.mxu0 0.0
    %564 = vmatprep.subr.mxu0 0.0
    %565 = vmatpush1.msra.mxu0 0.0
    %566 = vmatprep.mubr.f32.mxu0 0.0
    %567 = vmatmul.mubr.f32.gmra.mrb[0].mxu0 %v500
    %v568 = vpop.f32.mrb[0].mxu0
    %v569 = vadd.f32 0.0, %v568
    %v570 = vpop.f32.mrb[0].mxu0
    %571 = vdwg.mxu0
    %v572 = vsub.f32 %v495, %v569
    %573 = vset.pattern.permute.xlu0 8
    %574 = vperm.xlu0 %573, %v89
    %v575 = vpop.permute.xlu0 %574
    %v577 = vadd.f32 %v572, %v575
    %v578 = vsel %vm498, %v89, 0
    %580 = vmatprep.subr.mxu0 0.0
    %581 = vmatpush1.msra.mxu0 %v92
    %582 = vmatprep.subr.mxu0 0.0
    %583 = vmatpush1.msra.mxu0 0.0
    %584 = vmatprep.subr.mxu0 0.0
    %585 = vmatpush1.msra.mxu0 0.0
    %586 = vmatprep.subr.mxu0 0.0
    %587 = vmatpush1.msra.mxu0 0.0
    %588 = vmatprep.subr.mxu0 0.0
    %589 = vmatpush1.msra.mxu0 0.0
    %590 = vmatprep.subr.mxu0 0.0
    %591 = vmatpush1.msra.mxu0 0.0
    %592 = vmatprep.subr.mxu0 0.0
    %593 = vmatpush1.msra.mxu0 0.0
    %594 = vmatprep.subr.mxu0 0.0
    %595 = vmatpush1.msra.mxu0 0.0
    %596 = vmatprep.subr.mxu0 0.0
    %597 = vmatpush1.msra.mxu0 0.0
    %598 = vmatprep.subr.mxu0 0.0
    %599 = vmatpush1.msra.mxu0 0.0
    %600 = vmatprep.subr.mxu0 0.0
    %601 = vmatpush1.msra.mxu0 0.0
    %602 = vmatprep.subr.mxu0 0.0
    %603 = vmatpush1.msra.mxu0 0.0
    %604 = vmatprep.subr.mxu0 0.0
    %605 = vmatpush1.msra.mxu0 0.0
    %606 = vmatprep.subr.mxu0 0.0
    %607 = vmatpush1.msra.mxu0 0.0
    %608 = vmatprep.subr.mxu0 0.0
    %609 = vmatpush1.msra.mxu0 0.0
    %610 = vmatprep.subr.mxu0 0.0
    %611 = vmatpush1.msra.mxu0 0.0
    %612 = vmatprep.subr.mxu0 0.0
    %613 = vmatpush1.msra.mxu0 0.0
    %614 = vmatprep.subr.mxu0 0.0
    %615 = vmatpush1.msra.mxu0 0.0
    %616 = vmatprep.subr.mxu0 0.0
    %617 = vmatpush1.msra.mxu0 0.0
    %618 = vmatprep.subr.mxu0 0.0
    %619 = vmatpush1.msra.mxu0 0.0
    %620 = vmatprep.subr.mxu0 0.0
    %621 = vmatpush1.msra.mxu0 0.0
    %622 = vmatprep.subr.mxu0 0.0
    %623 = vmatpush1.msra.mxu0 0.0
    %624 = vmatprep.subr.mxu0 0.0
    %625 = vmatpush1.msra.mxu0 0.0
    %626 = vmatprep.subr.mxu0 0.0
    %627 = vmatpush1.msra.mxu0 0.0
    %628 = vmatprep.subr.mxu0 0.0
    %629 = vmatpush1.msra.mxu0 0.0
    %630 = vmatprep.subr.mxu0 0.0
    %631 = vmatpush1.msra.mxu0 0.0
    %632 = vmatprep.subr.mxu0 0.0
    %633 = vmatpush1.msra.mxu0 0.0
    %634 = vmatprep.subr.mxu0 0.0
    %635 = vmatpush1.msra.mxu0 0.0
    %636 = vmatprep.subr.mxu0 0.0
    %637 = vmatpush1.msra.mxu0 0.0
    %638 = vmatprep.subr.mxu0 0.0
    %639 = vmatpush1.msra.mxu0 0.0
    %640 = vmatprep.subr.mxu0 0.0
    %641 = vmatpush1.msra.mxu0 0.0
    %642 = vmatprep.subr.mxu0 0.0
    %643 = vmatpush1.msra.mxu0 0.0
    %644 = vmatprep.mubr.f32.mxu0 0.0
    %645 = vmatmul.mubr.f32.gmra.mrb[0].mxu0 %v578
    %v646 = vpop.f32.mrb[0].mxu0
    %v647 = vadd.f32 0.0, %v646
    %v648 = vpop.f32.mrb[0].mxu0
    %649 = vdwg.mxu0
    %v650 = vand.u32 2147483647, %v577
    %vm651 = vcmp.le.f32.partialorder %v650, 1.0
    %v652 = vmul.f32 %v577, 0.5
    %v653 = vmul.f32 %v652, %v577
    %v654 = vsub.f32 %v650, 0.5
    %v655 = vsel %vm651, %v653, %v654
    %vm656 = vcmp.lt.f32.partialorder %v577, 0.0
    %v657 = vsel %vm656, 1, 0
    %v658 = vcvt.s32.f32 %v657
    %v659 = vsub.f32 %v647, %v658
    %v660 = vand.u32 2147483647, %v659
    %v661 = vmul.f32 %v660, %v655
    %662 = vst [vmem:[#allocation8] sm:$0xff] %v577
    %663 = vst [vmem:[#allocation9] sm:$0xff] %v661
    %664 = vadd.xlane.f32.xlu0 %v661
    %v665 = vpop.xlane.xlu0 %664
    %v666 = vmul.f32 %v665, 0.0625
    %vm667 = vcmask 7168
    %668 = vst.msk [vmem:[%s5] sm:$0xff] %vm667, %v666
    // Predicated region
    $region34: #{tpu_custom_call.1} parent=1 // pred_check
      _
    $region35: #{tpu_custom_call.1} parent=1 // pred_check_branch
      %670 = sbr.rel (0) target = $region37
    $region36: #{tpu_custom_call.1} parent=1 // pred_region
      _
    $region37: #{tpu_custom_call.1} parent=1 // pred_fallthru
      _
    // Predicated region
    $region38: #{tpu_custom_call.1} parent=1 // pred_check
      _
    $region39: #{tpu_custom_call.1} parent=1 // pred_check_branch
      %672 = sbr.rel (0) target = $region41
    $region40: #{tpu_custom_call.1} parent=1 // pred_region
      %s674 = ssub.s32 128, 128
      %675 = vsyncadd [#allocation4], %s674
      %s677 = sshll.u32 [#allocation8], 4
      %s678 = int_to_ptr.vmem [resolvable:$true] %s677
      %680 = dma.vmem_to_hbm [thread:$0]  %s678, 128, %s6, [#allocation4]
    $region41: #{tpu_custom_call.1} parent=1 // pred_fallthru
      _
    // Predicated region
    $region42: #{tpu_custom_call.1} parent=1 // pred_check
      _
    $region43: #{tpu_custom_call.1} parent=1 // pred_check_branch
      %682 = sbr.rel (0) target = $region45
    $region44: #{tpu_custom_call.1} parent=1 // pred_region
      %s684 = ssub.s32 128, 128
      %685 = vsyncadd [#allocation10], %s684
      %s687 = sshll.u32 [#allocation9], 4
      %s688 = int_to_ptr.vmem [resolvable:$true] %s687
      %690 = dma.vmem_to_hbm [thread:$0]  %s688, 128, %s7, [#allocation10]
    $region45: #{tpu_custom_call.1} parent=1 // pred_fallthru
      _
    // Predicated region
    $region46: #{tpu_custom_call.1} parent=1 // pred_check
      _
    $region47: #{tpu_custom_call.1} parent=1 // pred_check_branch
      %692 = sbr.rel (0) target = $region49
    $region48: #{tpu_custom_call.1} parent=1 // pred_region
      _
    $region49: #{tpu_custom_call.1} parent=1 // pred_fallthru
      _
    // Predicated region
    $region50: #{tpu_custom_call.1} parent=1 // pred_check
      _
    $region51: #{tpu_custom_call.1} parent=1 // pred_check_branch
      %694 = sbr.rel (0) target = $region53
    $region52: #{tpu_custom_call.1} parent=1 // pred_region
      %695 = dma.done [#allocation4], 128
    $region53: #{tpu_custom_call.1} parent=1 // pred_fallthru
      _
    // Predicated region
    $region54: #{tpu_custom_call.1} parent=1 // pred_check
      _
    $region55: #{tpu_custom_call.1} parent=1 // pred_check_branch
      %697 = sbr.rel (0) target = $region57
    $region56: #{tpu_custom_call.1} parent=1 // pred_region
      %698 = dma.done [#allocation10], 128
    $region57: #{tpu_custom_call.1} parent=1 // pred_fallthru
      _
    %699 = vsyncpa [#allocation3], 1
    %700 = vsyncpa [#allocation6], 1
    %701 = vsyncpa [#allocation4], 1
    %702 = vsyncpa [#allocation10], 1

</llo_original>
